<compile_context>
chip_gen: v6e
topology: v6e:2x2x1
jax: 0.10.0
libtpu: 0.0.40
codegen_flags: <defaults>
</compile_context>

<pallas_src>
import math

import jax
import jax.numpy as jnp
from jax.experimental import pallas as pl
from jax.experimental.pallas import tpu as pltpu

_LANES = 128
_ALIGN = 8 * _LANES  # 1024: batch tile multiple -> full (8,128) sublane tiles


def _sigmoid(z):
    # Exact sigmoid, one EUP push (tanh) per call.
    return 0.5 * jnp.tanh(0.5 * z) + 0.5


def _fwd_kernel(w1_ref, b1_ref, w2_ref, b2_ref, x_ref, out_ref):
    """x_ref: (2, R, 128) dense slabs; out_ref: (R, 128)."""
    x0 = x_ref[0]
    x1 = x_ref[1]
    o = None
    for j in range(4):
        z = w1_ref[0, j] * x0 + w1_ref[1, j] * x1 + b1_ref[j]
        h = _sigmoid(z)
        o = w2_ref[j] * h if o is None else o + w2_ref[j] * h
    out_ref[...] = _sigmoid(o + b2_ref[0])


def _fwd_kernel_hidden(w1_ref, b1_ref, w2_ref, b2_ref, x_ref, hid_ref, out_ref):
    """Same as _fwd_kernel, additionally writes hidden (4, R, 128) via direct row stores."""
    x0 = x_ref[0]
    x1 = x_ref[1]
    o = None
    for j in range(4):
        z = w1_ref[0, j] * x0 + w1_ref[1, j] * x1 + b1_ref[j]
        h = _sigmoid(z)
        hid_ref[j] = h
        o = w2_ref[j] * h if o is None else o + w2_ref[j] * h
    out_ref[...] = _sigmoid(o + b2_ref[0])


def _round_up(v, m):
    return ((v + m - 1) // m) * m


def binary_classifier_forward(x, w1, b1, w2, b2, *, block_b=65536,
                              return_hidden=False, x_transposed=False):
    """Forward pass of BinaryClassifier.

    Args:
      x:  [B, 2] float32 (torch layout), or [2, B] if x_transposed=True
          (skips the one wrapper-side HBM relayout pass).
      w1: [2, 4] float32 (= torch fc1.weight.T)
      b1: [4]    float32
      w2: [4]    float32 (= torch fc2.weight[0])
      b2: [1]    float32
    Returns:
      out [B, 1], or (hidden [B, 4], out [B, 1]) if return_hidden=True.
    """
    if x_transposed:
        assert x.shape[0] == 2, "x_transposed=True expects x of shape (2, B)"
        B = x.shape[1]
        x_t = x
    else:
        assert x.shape[1] == 2, "expected x of shape (B, 2)"
        B = x.shape[0]
        x_t = x.T  # one HBM relayout pass; avoid by passing x_transposed=True

    # VMEM-aware tile selection (double-buffered x/out[/hid] blocks + kernel temps).
    rows = 3 + (4 if return_hidden else 0)          # f32 rows per batch element in HBM I/O
    bytes_per_b = (2 * rows + 8) * 4                # 2x-buffered I/O + ~8 rows of temporaries
    vmem_budget = 40 << 20                          # headroom under v7x's 64 MiB physical VMEM
    tb_cap = max(_ALIGN, (vmem_budget // bytes_per_b) // _ALIGN * _ALIGN)

    tb = max(_ALIGN, min(_round_up(block_b, _ALIGN), _round_up(B, _ALIGN), tb_cap))
    # v7x megacore: keep >=2 "parallel" grid steps when the batch can be split,
    # instead of letting a single huge tile leave one TensorCore idle.
    if _round_up(B, _ALIGN) >= 2 * _ALIGN and pl.cdiv(B, tb) < 2:
        tb = max(_ALIGN, _round_up(pl.cdiv(B, 2), _ALIGN))

    b_pad = _round_up(B, tb)
    grid = (b_pad // tb,)
    nb = b_pad // _LANES          # sublane rows in the dense slabs
    rb = tb // _LANES             # sublane rows per grid step (multiple of 8)

    if b_pad != B:
        x_t = jnp.pad(x_t, ((0, 0), (0, b_pad - B)))
    # (2, B_pad) -> (2, NB, 128): free bitcast reshape into fully dense tiles.
    x_d = x_t.reshape(2, nb, _LANES)

    smem = pl.BlockSpec(memory_space=pltpu.MemorySpace.SMEM)
    x_spec = pl.BlockSpec((2, rb, _LANES), lambda i: (0, i, 0))
    out_spec = pl.BlockSpec((rb, _LANES), lambda i: (i, 0))

    compiler_params = pltpu.CompilerParams(
        dimension_semantics=("parallel",),
        vmem_limit_bytes=min(max(bytes_per_b * tb + (4 << 20), 32 << 20), 48 << 20),
    )

    if return_hidden:
        hid_spec = pl.BlockSpec((4, rb, _LANES), lambda i: (0, i, 0))
        hid_d, out_d = pl.pallas_call(
            _fwd_kernel_hidden,
            grid=grid,
            in_specs=[smem, smem, smem, smem, x_spec],
            out_specs=(hid_spec, out_spec),
            out_shape=(jax.ShapeDtypeStruct((4, nb, _LANES), jnp.float32),
                       jax.ShapeDtypeStruct((nb, _LANES), jnp.float32)),
            compiler_params=compiler_params,
        )(w1, b1, w2, b2, x_d)
        out = out_d.reshape(b_pad, 1)[:B]            # free bitcast + cheap prefix slice
        hidden = hid_d.reshape(4, b_pad)[:, :B].T    # opt-in path pays one transpose pass
        return hidden, out

    out_d = pl.pallas_call(
        _fwd_kernel,
        grid=grid,
        in_specs=[smem, smem, smem, smem, x_spec],
        out_specs=out_spec,
        out_shape=jax.ShapeDtypeStruct((nb, _LANES), jnp.float32),
        compiler_params=compiler_params,
    )(w1, b1, w2, b2, x_d)
    return out_d.reshape(b_pad, 1)[:B]


def init_params(key):
    """Mimics torch.nn.Linear default init: U(-1/sqrt(fan_in), 1/sqrt(fan_in))."""
    k1, k2, k3, k4 = jax.random.split(key, 4)
    bound1 = 1.0 / math.sqrt(2.0)  # fc1: in_features = 2
    bound2 = 1.0 / math.sqrt(4.0)  # fc2: in_features = 4
    w1 = jax.random.uniform(k1, (2, 4), jnp.float32, -bound1, bound1)  # [in, out]
    b1 = jax.random.uniform(k2, (4,), jnp.float32, -bound1, bound1)
    w2 = jax.random.uniform(k3, (4,), jnp.float32, -bound2, bound2)    # fc2 weight row
    b2 = jax.random.uniform(k4, (1,), jnp.float32, -bound2, bound2)
    return w1, b1, w2, b2


def _reference_forward(x, w1, b1, w2, b2):
    h = jax.nn.sigmoid(x @ w1 + b1)
    o = jax.nn.sigmoid(h @ w2[:, None] + b2)
    return h, o


if __name__ == "__main__":
    key = jax.random.PRNGKey(0)
    pkey, xkey = jax.random.split(key)
    w1, b1, w2, b2 = init_params(pkey)

    batch = 8
    x = jax.random.normal(xkey, (batch, 2), jnp.float32)

    ref_hidden, ref_out = _reference_forward(x, w1, b1, w2, b2)

    # Default path: torch forward() semantics (only the final sigmoid output).
    out = binary_classifier_forward(x, w1, b1, w2, b2)
    jax.block_until_ready(out)
    assert out.shape == (batch, 1)
    assert jnp.allclose(out, ref_out, atol=1e-5, rtol=1e-5)

    # Opt-in hidden output (matches torch's self.hidden_output attribute).
    hidden, out2 = binary_classifier_forward(x, w1, b1, w2, b2, return_hidden=True)
    jax.block_until_ready(out2)
    assert jnp.allclose(hidden, ref_hidden, atol=1e-5, rtol=1e-5)
    assert jnp.allclose(out2, ref_out, atol=1e-5, rtol=1e-5)

    # Pre-transposed (2, B) input path: skips the wrapper-side HBM relayout pass.
    out3 = binary_classifier_forward(jnp.asarray(x.T), w1, b1, w2, b2, x_transposed=True)
    jax.block_until_ready(out3)
    assert jnp.allclose(out3, ref_out, atol=1e-5, rtol=1e-5)

    print("KERNEL_OK")
</pallas_src>

<mosaic_0001>
module attributes {stable_mosaic.version = 11 : i64} {
  func.func @_fwd_kernel(%arg0: i32, %arg1: memref<2x4xf32, #tpu.memory_space<smem>>, %arg2: memref<4xf32, #tpu.memory_space<smem>>, %arg3: memref<4xf32, #tpu.memory_space<smem>>, %arg4: memref<1xf32, #tpu.memory_space<smem>>, %arg5: memref<2x8x128xf32, #tpu.memory_space<vmem>>, %arg6: memref<8x128xf32, #tpu.memory_space<vmem>>) attributes {dimension_semantics = [#tpu.dimension_semantics<parallel>], iteration_bounds = array<i64: 1>, scalar_prefetch = 0 : i64, scratch_operands = 0 : i64, tpu.core_type = #tpu.core_type<tc>, window_params = [{transform_indices = @transform_0, window_bounds = array<i64: 2, 4>}, {transform_indices = @transform_1, window_bounds = array<i64: 4>}, {transform_indices = @transform_2, window_bounds = array<i64: 4>}, {transform_indices = @transform_3, window_bounds = array<i64: 1>}, {transform_indices = @transform_4, window_bounds = array<i64: 2, 8, 128>}, {transform_indices = @transform_5, window_bounds = array<i64: 8, 128>}]} {
    %c0 = arith.constant 0 : index
    %c0_0 = arith.constant 0 : index
    %c0_1 = arith.constant 0 : index
    %0 = vector.load %arg5[%c0, %c0_0, %c0_1] : memref<2x8x128xf32, #tpu.memory_space<vmem>>, vector<1x8x128xf32>
    %1 = vector.shape_cast %0 : vector<1x8x128xf32> to vector<8x128xf32>
    %c1 = arith.constant 1 : index
    %c0_2 = arith.constant 0 : index
    %c0_3 = arith.constant 0 : index
    %2 = vector.load %arg5[%c1, %c0_2, %c0_3] : memref<2x8x128xf32, #tpu.memory_space<vmem>>, vector<1x8x128xf32>
    %3 = vector.shape_cast %2 : vector<1x8x128xf32> to vector<8x128xf32>
    %c0_4 = arith.constant 0 : index
    %c0_5 = arith.constant 0 : index
    %4 = memref.load %arg1[%c0_4, %c0_5] : memref<2x4xf32, #tpu.memory_space<smem>>
    %5 = vector.broadcast %4 : f32 to vector<8x128xf32>
    %6 = arith.mulf %5, %1 : vector<8x128xf32>
    %c1_6 = arith.constant 1 : index
    %c0_7 = arith.constant 0 : index
    %7 = memref.load %arg1[%c1_6, %c0_7] : memref<2x4xf32, #tpu.memory_space<smem>>
    %8 = vector.broadcast %7 : f32 to vector<8x128xf32>
    %9 = arith.mulf %8, %3 : vector<8x128xf32>
    %10 = arith.addf %6, %9 : vector<8x128xf32>
    %c0_8 = arith.constant 0 : index
    %11 = memref.load %arg2[%c0_8] : memref<4xf32, #tpu.memory_space<smem>>
    %12 = vector.broadcast %11 : f32 to vector<8x128xf32>
    %13 = arith.addf %10, %12 : vector<8x128xf32>
    %cst = arith.constant 5.000000e-01 : f32
    %14 = vector.broadcast %cst : f32 to vector<8x128xf32>
    %15 = arith.mulf %14, %13 : vector<8x128xf32>
    %16 = math.tanh %15 : vector<8x128xf32>
    %cst_9 = arith.constant 5.000000e-01 : f32
    %17 = vector.broadcast %cst_9 : f32 to vector<8x128xf32>
    %18 = arith.mulf %17, %16 : vector<8x128xf32>
    %cst_10 = arith.constant 5.000000e-01 : f32
    %19 = vector.broadcast %cst_10 : f32 to vector<8x128xf32>
    %20 = arith.addf %18, %19 : vector<8x128xf32>
    %c0_11 = arith.constant 0 : index
    %21 = memref.load %arg3[%c0_11] : memref<4xf32, #tpu.memory_space<smem>>
    %22 = vector.broadcast %21 : f32 to vector<8x128xf32>
    %23 = arith.mulf %22, %20 : vector<8x128xf32>
    %c0_12 = arith.constant 0 : index
    %c1_13 = arith.constant 1 : index
    %24 = memref.load %arg1[%c0_12, %c1_13] : memref<2x4xf32, #tpu.memory_space<smem>>
    %25 = vector.broadcast %24 : f32 to vector<8x128xf32>
    %26 = arith.mulf %25, %1 : vector<8x128xf32>
    %c1_14 = arith.constant 1 : index
    %c1_15 = arith.constant 1 : index
    %27 = memref.load %arg1[%c1_14, %c1_15] : memref<2x4xf32, #tpu.memory_space<smem>>
    %28 = vector.broadcast %27 : f32 to vector<8x128xf32>
    %29 = arith.mulf %28, %3 : vector<8x128xf32>
    %30 = arith.addf %26, %29 : vector<8x128xf32>
    %c1_16 = arith.constant 1 : index
    %31 = memref.load %arg2[%c1_16] : memref<4xf32, #tpu.memory_space<smem>>
    %32 = vector.broadcast %31 : f32 to vector<8x128xf32>
    %33 = arith.addf %30, %32 : vector<8x128xf32>
    %cst_17 = arith.constant 5.000000e-01 : f32
    %34 = vector.broadcast %cst_17 : f32 to vector<8x128xf32>
    %35 = arith.mulf %34, %33 : vector<8x128xf32>
    %36 = math.tanh %35 : vector<8x128xf32>
    %cst_18 = arith.constant 5.000000e-01 : f32
    %37 = vector.broadcast %cst_18 : f32 to vector<8x128xf32>
    %38 = arith.mulf %37, %36 : vector<8x128xf32>
    %cst_19 = arith.constant 5.000000e-01 : f32
    %39 = vector.broadcast %cst_19 : f32 to vector<8x128xf32>
    %40 = arith.addf %38, %39 : vector<8x128xf32>
    %c1_20 = arith.constant 1 : index
    %41 = memref.load %arg3[%c1_20] : memref<4xf32, #tpu.memory_space<smem>>
    %42 = vector.broadcast %41 : f32 to vector<8x128xf32>
    %43 = arith.mulf %42, %40 : vector<8x128xf32>
    %44 = arith.addf %23, %43 : vector<8x128xf32>
    %c0_21 = arith.constant 0 : index
    %c2 = arith.constant 2 : index
    %45 = memref.load %arg1[%c0_21, %c2] : memref<2x4xf32, #tpu.memory_space<smem>>
    %46 = vector.broadcast %45 : f32 to vector<8x128xf32>
    %47 = arith.mulf %46, %1 : vector<8x128xf32>
    %c1_22 = arith.constant 1 : index
    %c2_23 = arith.constant 2 : index
    %48 = memref.load %arg1[%c1_22, %c2_23] : memref<2x4xf32, #tpu.memory_space<smem>>
    %49 = vector.broadcast %48 : f32 to vector<8x128xf32>
    %50 = arith.mulf %49, %3 : vector<8x128xf32>
    %51 = arith.addf %47, %50 : vector<8x128xf32>
    %c2_24 = arith.constant 2 : index
    %52 = memref.load %arg2[%c2_24] : memref<4xf32, #tpu.memory_space<smem>>
    %53 = vector.broadcast %52 : f32 to vector<8x128xf32>
    %54 = arith.addf %51, %53 : vector<8x128xf32>
    %cst_25 = arith.constant 5.000000e-01 : f32
    %55 = vector.broadcast %cst_25 : f32 to vector<8x128xf32>
    %56 = arith.mulf %55, %54 : vector<8x128xf32>
    %57 = math.tanh %56 : vector<8x128xf32>
    %cst_26 = arith.constant 5.000000e-01 : f32
    %58 = vector.broadcast %cst_26 : f32 to vector<8x128xf32>
    %59 = arith.mulf %58, %57 : vector<8x128xf32>
    %cst_27 = arith.constant 5.000000e-01 : f32
    %60 = vector.broadcast %cst_27 : f32 to vector<8x128xf32>
    %61 = arith.addf %59, %60 : vector<8x128xf32>
    %c2_28 = arith.constant 2 : index
    %62 = memref.load %arg3[%c2_28] : memref<4xf32, #tpu.memory_space<smem>>
    %63 = vector.broadcast %62 : f32 to vector<8x128xf32>
    %64 = arith.mulf %63, %61 : vector<8x128xf32>
    %65 = arith.addf %44, %64 : vector<8x128xf32>
    %c0_29 = arith.constant 0 : index
    %c3 = arith.constant 3 : index
    %66 = memref.load %arg1[%c0_29, %c3] : memref<2x4xf32, #tpu.memory_space<smem>>
    %67 = vector.broadcast %66 : f32 to vector<8x128xf32>
    %68 = arith.mulf %67, %1 : vector<8x128xf32>
    %c1_30 = arith.constant 1 : index
    %c3_31 = arith.constant 3 : index
    %69 = memref.load %arg1[%c1_30, %c3_31] : memref<2x4xf32, #tpu.memory_space<smem>>
    %70 = vector.broadcast %69 : f32 to vector<8x128xf32>
    %71 = arith.mulf %70, %3 : vector<8x128xf32>
    %72 = arith.addf %68, %71 : vector<8x128xf32>
    %c3_32 = arith.constant 3 : index
    %73 = memref.load %arg2[%c3_32] : memref<4xf32, #tpu.memory_space<smem>>
    %74 = vector.broadcast %73 : f32 to vector<8x128xf32>
    %75 = arith.addf %72, %74 : vector<8x128xf32>
    %cst_33 = arith.constant 5.000000e-01 : f32
    %76 = vector.broadcast %cst_33 : f32 to vector<8x128xf32>
    %77 = arith.mulf %76, %75 : vector<8x128xf32>
    %78 = math.tanh %77 : vector<8x128xf32>
    %cst_34 = arith.constant 5.000000e-01 : f32
    %79 = vector.broadcast %cst_34 : f32 to vector<8x128xf32>
    %80 = arith.mulf %79, %78 : vector<8x128xf32>
    %cst_35 = arith.constant 5.000000e-01 : f32
    %81 = vector.broadcast %cst_35 : f32 to vector<8x128xf32>
    %82 = arith.addf %80, %81 : vector<8x128xf32>
    %c3_36 = arith.constant 3 : index
    %83 = memref.load %arg3[%c3_36] : memref<4xf32, #tpu.memory_space<smem>>
    %84 = vector.broadcast %83 : f32 to vector<8x128xf32>
    %85 = arith.mulf %84, %82 : vector<8x128xf32>
    %86 = arith.addf %65, %85 : vector<8x128xf32>
    %c0_37 = arith.constant 0 : index
    %87 = memref.load %arg4[%c0_37] : memref<1xf32, #tpu.memory_space<smem>>
    %88 = vector.broadcast %87 : f32 to vector<8x128xf32>
    %89 = arith.addf %86, %88 : vector<8x128xf32>
    %cst_38 = arith.constant 5.000000e-01 : f32
    %90 = vector.broadcast %cst_38 : f32 to vector<8x128xf32>
    %91 = arith.mulf %90, %89 : vector<8x128xf32>
    %92 = math.tanh %91 : vector<8x128xf32>
    %cst_39 = arith.constant 5.000000e-01 : f32
    %93 = vector.broadcast %cst_39 : f32 to vector<8x128xf32>
    %94 = arith.mulf %93, %92 : vector<8x128xf32>
    %cst_40 = arith.constant 5.000000e-01 : f32
    %95 = vector.broadcast %cst_40 : f32 to vector<8x128xf32>
    %96 = arith.addf %94, %95 : vector<8x128xf32>
    %c0_41 = arith.constant 0 : index
    %c0_42 = arith.constant 0 : index
    %97 = vector.load %arg6[%c0_41, %c0_42] : memref<8x128xf32, #tpu.memory_space<vmem>>, vector<8x128xf32>
    tpu.vector_store %arg6[%c0_41, %c0_42], %96 {strides = array<i32>} : memref<8x128xf32, #tpu.memory_space<vmem>>, vector<8x128xf32>,
    return
  }
  func.func @transform_0(%arg0: i32) -> (i32, i32) {
    %c0_i32 = arith.constant 0 : i32
    %c0_i32_0 = arith.constant 0 : i32
    %c0_i32_1 = arith.constant 0 : i32
    return %c0_i32, %c0_i32_0 : i32, i32
  }
  func.func @transform_1(%arg0: i32) -> i32 {
    %c0_i32 = arith.constant 0 : i32
    %c0_i32_0 = arith.constant 0 : i32
    return %c0_i32 : i32
  }
  func.func @transform_2(%arg0: i32) -> i32 {
    %c0_i32 = arith.constant 0 : i32
    %c0_i32_0 = arith.constant 0 : i32
    return %c0_i32 : i32
  }
  func.func @transform_3(%arg0: i32) -> i32 {
    %c0_i32 = arith.constant 0 : i32
    %c0_i32_0 = arith.constant 0 : i32
    return %c0_i32 : i32
  }
  func.func @transform_4(%arg0: i32) -> (i32, i32, i32) {
    %c0_i32 = arith.constant 0 : i32
    %c0_i32_0 = arith.constant 0 : i32
    %c0_i32_1 = arith.constant 0 : i32
    return %c0_i32, %arg0, %c0_i32_0 : i32, i32, i32
  }
  func.func @transform_5(%arg0: i32) -> (i32, i32) {
    %c0_i32 = arith.constant 0 : i32
    %c0_i32_0 = arith.constant 0 : i32
    return %arg0, %c0_i32 : i32, i32
  }
}

</mosaic_0001>

<llo_original>
// kernel: tpu_custom_call.1
$region0: #{tpu_custom_call.1}
  #allocation0 [shape = 'u32[]', space=smem, size = 0x4, offset = 0x4, fixed_abs, tag = 'smem constant byte address 0x4 - core index']
  #allocation1 [shape = 'u32[144,128]{1,0:T(1,128)}', space=vmem, size = 0x12000, scoped, tag = 'internal scratch']
  #allocation2 [shape = 'f32[1]{0:T(128)S(6)}', space=smem, size = 0x200, scoped, tag = 'scoped memory for tpu_custom_call.1']
  %s0 = inlined_call_operand.vmem [shape: f32[2,4], index: 0, kind: input, shape index: {}]
  %s1 = inlined_call_operand.vmem [shape: f32[4], index: 1, kind: input, shape index: {}]
  %s2 = inlined_call_operand.vmem [shape: f32[4], index: 2, kind: input, shape index: {}]
  %s3 = inlined_call_operand.<no memory space> [shape: f32[1], index: 3, kind: input, shape index: {}]
  %s4 = inlined_call_operand.hbm [shape: f32[2,8,128], index: 4, kind: input, shape index: {}]
  %s5 = inlined_call_operand.hbm [shape: f32[8,128], index: 5, kind: output, shape index: {}]
  %s6 = sld [smem:[#allocation0]]
  $region46: #{tpu_custom_call.1} parent=0
    _
  %s8 = ssub.s32 1, %s6
  %s9 = scalar_select 0, %s8, %s6
  %10 = sst [smem:[#allocation2]] %s3
  $region1: #{tpu_custom_call.1} parent=0
    #allocation3 [shape = 'u8[1024]{0}', space=smem, size = 0x400, scoped, tag = 'input window, operand 0, single buffered']
    #allocation4 [shape = 's32[1]{0}', space=sflag, size = 0x4, scoped, tag = 'scoped memory for tpu_custom_call.1']
    #allocation5 [shape = 's32[1]{0}', space=sflag, size = 0x4, scoped, tag = 'scoped memory for tpu_custom_call.1']
    #allocation6 [shape = 's32[1]{0}', space=sflag, size = 0x4, scoped, tag = 'scoped memory for tpu_custom_call.1']
    #allocation7 [shape = 'u8[512]{0}', space=smem, size = 0x200, scoped, tag = 'input window, operand 1, single buffered']
    #allocation8 [shape = 's32[1]{0}', space=sflag, size = 0x4, scoped, tag = 'scoped memory for tpu_custom_call.1']
    #allocation9 [shape = 'u8[512]{0}', space=smem, size = 0x200, scoped, tag = 'input window, operand 2, single buffered']
    #allocation10 [shape = 'u8[8192]{0}', space=vmem, size = 0x2000, scoped, tag = 'input window, operand 4, single buffered']
    #allocation11 [shape = 'u8[4096]{0}', space=vmem, size = 0x1000, scoped, tag = 'output window, operand 0, single buffered']
    %11 = vsyncpa [#allocation6], 0
    %12 = vsyncpa [#allocation8], 0
    %13 = vsyncpa [#allocation4], 0
    %14 = vsyncpa [#allocation5], 0
    // Predicated region
    $region2: #{tpu_custom_call.1} parent=1 // pred_check
      _
    $region3: #{tpu_custom_call.1} parent=1 // pred_check_branch
      %16 = sbr.rel (0) target = $region5
    $region4: #{tpu_custom_call.1} parent=1 // pred_region
      %s18 = ssub.s32 32, 32
      %19 = vsyncadd [#allocation6], %s18
      %s21 = sshll.u32 %s0, 4
      %s22 = int_to_ptr.vmem [resolvable:$true] %s21
      %24 = dma.vmem_to_smem %s22, 32, [#allocation3], [#allocation6]
    $region5: #{tpu_custom_call.1} parent=1 // pred_fallthru
      _
    // Predicated region
    $region6: #{tpu_custom_call.1} parent=1 // pred_check
      _
    $region7: #{tpu_custom_call.1} parent=1 // pred_check_branch
      %26 = sbr.rel (0) target = $region9
    $region8: #{tpu_custom_call.1} parent=1 // pred_region
      %s28 = ssub.s32 16, 16
      %29 = vsyncadd [#allocation8], %s28
      %s31 = sshll.u32 %s1, 4
      %s32 = int_to_ptr.vmem [resolvable:$true] %s31
      %34 = dma.vmem_to_smem %s32, 16, [#allocation7], [#allocation8]
    $region9: #{tpu_custom_call.1} parent=1 // pred_fallthru
      _
    // Predicated region
    $region10: #{tpu_custom_call.1} parent=1 // pred_check
      _
    $region11: #{tpu_custom_call.1} parent=1 // pred_check_branch
      %36 = sbr.rel (0) target = $region13
    $region12: #{tpu_custom_call.1} parent=1 // pred_region
      %s38 = ssub.s32 16, 16
      %39 = vsyncadd [#allocation8], %s38
      %s41 = sshll.u32 %s2, 4
      %s42 = int_to_ptr.vmem [resolvable:$true] %s41
      %44 = dma.vmem_to_smem %s42, 16, [#allocation9], [#allocation8]
    $region13: #{tpu_custom_call.1} parent=1 // pred_fallthru
      _
    // Predicated region
    $region14: #{tpu_custom_call.1} parent=1 // pred_check
      _
    $region15: #{tpu_custom_call.1} parent=1 // pred_check_branch
      %46 = sbr.rel (0) target = $region17
    $region16: #{tpu_custom_call.1} parent=1 // pred_region
      _
    $region17: #{tpu_custom_call.1} parent=1 // pred_fallthru
      _
    // Predicated region
    $region18: #{tpu_custom_call.1} parent=1 // pred_check
      _
    $region19: #{tpu_custom_call.1} parent=1 // pred_check_branch
      %48 = sbr.rel (0) target = $region21
    $region20: #{tpu_custom_call.1} parent=1 // pred_region
      %s50 = ssub.s32 256, 256
      %51 = vsyncadd [#allocation4], %s50
      %s52 = sshll.u32 [#allocation10], 4
      %s53 = int_to_ptr.vmem [resolvable:$true] %s52
      %58 = dma.hbm_to_vmem [thread:$0]  %s4, 256, %s53, [#allocation4], 128, 128, 8
    $region21: #{tpu_custom_call.1} parent=1 // pred_fallthru
      _
    // Predicated region
    $region22: #{tpu_custom_call.1} parent=1 // pred_check
      _
    $region23: #{tpu_custom_call.1} parent=1 // pred_check_branch
      %60 = sbr.rel (0) target = $region25
    $region24: #{tpu_custom_call.1} parent=1 // pred_region
      %61 = dma.done [#allocation6], 32
    $region25: #{tpu_custom_call.1} parent=1 // pred_fallthru
      _
    // Predicated region
    $region26: #{tpu_custom_call.1} parent=1 // pred_check
      _
    $region27: #{tpu_custom_call.1} parent=1 // pred_check_branch
      %63 = sbr.rel (0) target = $region29
    $region28: #{tpu_custom_call.1} parent=1 // pred_region
      %64 = dma.done [#allocation8], 16
    $region29: #{tpu_custom_call.1} parent=1 // pred_fallthru
      _
    // Predicated region
    $region30: #{tpu_custom_call.1} parent=1 // pred_check
      _
    $region31: #{tpu_custom_call.1} parent=1 // pred_check_branch
      %66 = sbr.rel (0) target = $region33
    $region32: #{tpu_custom_call.1} parent=1 // pred_region
      %67 = dma.done [#allocation8], 16
    $region33: #{tpu_custom_call.1} parent=1 // pred_fallthru
      _
    // Predicated region
    $region34: #{tpu_custom_call.1} parent=1 // pred_check
      _
    $region35: #{tpu_custom_call.1} parent=1 // pred_check_branch
      %69 = sbr.rel (0) target = $region37
    $region36: #{tpu_custom_call.1} parent=1 // pred_region
      %70 = dma.done [#allocation4], 256
    $region37: #{tpu_custom_call.1} parent=1 // pred_fallthru
      _
    %71 = sfence
    %v72 = vld [vmem:[#allocation10] sm:$0xff]
    %s73 = scalar_lea.vmem [#allocation10], 8
    %v74 = vld [vmem:[%s73] sm:$0xff]
    %s75 = sld [smem:[#allocation3]]
    %v76 = vstv %s75
    %v77 = vmul.f32 %v76, %v72
    %s78 = sld [smem:[#allocation3 + $0x80]]
    %v79 = vstv %s78
    %v80 = vmul.f32 %v79, %v74
    %v81 = vadd.f32 %v77, %v80
    %s82 = sld [smem:[#allocation7]]
    %v83 = vstv %s82
    %v84 = vadd.f32 %v81, %v83
    %v85 = vmul.f32 %v84, 0.5
    %v86 = vtanh.pop %v85
    %v87 = vmul.f32 %v86, 0.5
    %v88 = vadd.f32 %v87, 0.5
    %s89 = sld [smem:[#allocation9]]
    %v90 = vstv %s89
    %v91 = vmul.f32 %v90, %v88
    %s92 = sld [smem:[#allocation3 + $0x1]]
    %v93 = vstv %s92
    %v94 = vmul.f32 %v93, %v72
    %s95 = sld [smem:[#allocation3 + $0x81]]
    %v96 = vstv %s95
    %v97 = vmul.f32 %v96, %v74
    %v98 = vadd.f32 %v94, %v97
    %s99 = sld [smem:[#allocation7 + $0x1]]
    %v100 = vstv %s99
    %v101 = vadd.f32 %v98, %v100
    %v102 = vmul.f32 %v101, 0.5
    %v103 = vtanh.pop %v102
    %v104 = vmul.f32 %v103, 0.5
    %v105 = vadd.f32 %v104, 0.5
    %s106 = sld [smem:[#allocation9 + $0x1]]
    %v107 = vstv %s106
    %v108 = vmul.f32 %v107, %v105
    %v109 = vadd.f32 %v91, %v108
    %s110 = sld [smem:[#allocation3 + $0x2]]
    %v111 = vstv %s110
    %v112 = vmul.f32 %v111, %v72
    %s113 = sld [smem:[#allocation3 + $0x82]]
    %v114 = vstv %s113
    %v115 = vmul.f32 %v114, %v74
    %v116 = vadd.f32 %v112, %v115
    %s117 = sld [smem:[#allocation7 + $0x2]]
    %v118 = vstv %s117
    %v119 = vadd.f32 %v116, %v118
    %v120 = vmul.f32 %v119, 0.5
    %v121 = vtanh.pop %v120
    %v122 = vmul.f32 %v121, 0.5
    %v123 = vadd.f32 %v122, 0.5
    %s124 = sld [smem:[#allocation9 + $0x2]]
    %v125 = vstv %s124
    %v126 = vmul.f32 %v125, %v123
    %v127 = vadd.f32 %v109, %v126
    %s128 = sld [smem:[#allocation3 + $0x3]]
    %v129 = vstv %s128
    %v130 = vmul.f32 %v129, %v72
    %s131 = sld [smem:[#allocation3 + $0x83]]
    %v132 = vstv %s131
    %v133 = vmul.f32 %v132, %v74
    %v134 = vadd.f32 %v130, %v133
    %s135 = sld [smem:[#allocation7 + $0x3]]
    %v136 = vstv %s135
    %v137 = vadd.f32 %v134, %v136
    %v138 = vmul.f32 %v137, 0.5
    %v139 = vtanh.pop %v138
    %v140 = vmul.f32 %v139, 0.5
    %v141 = vadd.f32 %v140, 0.5
    %s142 = sld [smem:[#allocation9 + $0x3]]
    %v143 = vstv %s142
    %v144 = vmul.f32 %v143, %v141
    %v145 = vadd.f32 %v127, %v144
    %s146 = sld [smem:[#allocation2]]
    %v147 = vstv %s146
    %v148 = vadd.f32 %v145, %v147
    %v149 = vmul.f32 %v148, 0.5
    %v150 = vtanh.pop %v149
    %v151 = vmul.f32 %v150, 0.5
    %v152 = vadd.f32 %v151, 0.5
    %153 = vst [vmem:[#allocation11] sm:$0xff] %v152
    // Predicated region
    $region38: #{tpu_custom_call.1} parent=1 // pred_check
      _
    $region39: #{tpu_custom_call.1} parent=1 // pred_check_branch
      %155 = sbr.rel (0) target = $region41
    $region40: #{tpu_custom_call.1} parent=1 // pred_region
      %s157 = ssub.s32 128, 128
      %158 = vsyncadd [#allocation5], %s157
      %s160 = sshll.u32 [#allocation11], 4
      %s161 = int_to_ptr.vmem [resolvable:$true] %s160
      %163 = dma.vmem_to_hbm [thread:$0]  %s161, 128, %s5, [#allocation5]
    $region41: #{tpu_custom_call.1} parent=1 // pred_fallthru
      _
    // Predicated region
    $region42: #{tpu_custom_call.1} parent=1 // pred_check
      _
    $region43: #{tpu_custom_call.1} parent=1 // pred_check_branch
      %165 = sbr.rel (0) target = $region45
    $region44: #{tpu_custom_call.1} parent=1 // pred_region
      %166 = dma.done [#allocation5], 128
    $region45: #{tpu_custom_call.1} parent=1 // pred_fallthru
      _
    %167 = vsyncpa [#allocation4], 1
    %168 = vsyncpa [#allocation5], 1
    %169 = vsyncpa [#allocation6], 1
    %170 = vsyncpa [#allocation8], 1

</llo_original>
